<compile_context>
chip_gen: v7x
topology: tpu7x:2x2x1
jax: 0.10.0
libtpu: 0.0.40
codegen_flags: <defaults>
</compile_context>

<pallas_src>
import functools
from typing import List

import jax
import jax.numpy as jnp
from jax.experimental import pallas as pl
from jax.experimental.pallas import tpu as pltpu

ARG_SPLITTER_KEYWORD = "a1T_ARg_SpliTTERKeyword"

# Small demo shapes (the dispatcher itself is shape-agnostic).
BATCH = 8
HIDDEN = 32


# ----------------------------------------------------------------------------
# Helpers
# ----------------------------------------------------------------------------
def _round_up(v: int, m: int) -> int:
    return (v + m - 1) // m * m


def _pad2d(a, rows: int, cols: int):
    r, c = a.shape
    if r == rows and c == cols:
        return a
    return jnp.pad(a, ((0, rows - r), (0, cols - c)))


def _vmem_limit_bytes() -> int:
    """Generation-aware scoped-VMEM limit (v7x has only 64 MiB physical)."""
    try:
        cap = int(pltpu.get_tpu_info().vmem_capacity_bytes)
    except Exception:
        cap = 64 * 1024 * 1024
    return min(cap * 3 // 4, 64 * 1024 * 1024)


# ----------------------------------------------------------------------------
# Pallas kernel: the synthetic "engine" hot path.
# Grid = (M tiles, N tiles, K tiles), K last (reduction axis).
# ----------------------------------------------------------------------------
def _make_engine_kernel(*, tk: int, tn: int, gk: int, w_resident: bool,
                        hoist_cast: bool):
    """Builds the kernel body with the static tiling decisions baked in."""

    def kernel(xk_ref, w_ref, y0_ref, y1_ref, o0_ref, o1_ref, *scratch):
        si = 0
        acc_ref = None
        xbf_ref = None
        if gk > 1:
            acc_ref = scratch[si]
            si += 1
        if hoist_cast:
            xbf_ref = scratch[si]
            si += 1

        j = pl.program_id(1)
        k = pl.program_id(2)

        # ---- once per M tile (first (j,k) step): o1 + hoisted bf16 cast ----
        # o1's output block index depends only on the M axis, so it stays
        # resident in VMEM across the whole (j,k) sweep and is flushed to HBM
        # exactly once per M tile.
        @pl.when(jnp.logical_and(j == 0, k == 0))
        def _per_m_tile():
            x_f32 = xk_ref[...].astype(jnp.float32)
            if hoist_cast:
                xbf_ref[...] = xk_ref[...].astype(jnp.bfloat16)
            o1_ref[...] = (x_f32 + y1_ref[...].astype(jnp.float32)).astype(
                o1_ref.dtype
            )

        # ---- o0 path: MXU matmul fed from the resident x slab --------------
        k_off = pl.multiple_of(k * tk, 128)
        if hoist_cast:
            x_tile = xbf_ref[:, pl.ds(k_off, tk)]
        else:
            x_tile = xk_ref[:, pl.ds(k_off, tk)].astype(jnp.bfloat16)

        if w_resident:
            j_off = pl.multiple_of(j * tn, 128)
            w_tile = w_ref[pl.ds(k_off, tk), pl.ds(j_off, tn)]
        else:
            w_tile = w_ref[...]

        part = jnp.dot(x_tile, w_tile, preferred_element_type=jnp.float32)

        if gk > 1:
            @pl.when(k == 0)
            def _init_acc():
                acc_ref[...] = jnp.zeros_like(acc_ref)

            acc_ref[...] += part

            @pl.when(k == pl.num_programs(2) - 1)
            def _finalize_o0():
                # Epilogue in f32 on the VPU (v5e has no bf16 VPU path).
                acc = acc_ref[...] + y0_ref[...].astype(jnp.float32)
                o0_ref[...] = jnp.maximum(acc, 0.0).astype(o0_ref.dtype)
        else:
            # Single K step: no accumulator scratch, no init/finalize gating.
            acc = part + y0_ref[...].astype(jnp.float32)
            o0_ref[...] = jnp.maximum(acc, 0.0).astype(o0_ref.dtype)

    return kernel


def _plan_tiles(M, K, N, in_bytes, out_bytes, tm, tn, tk, budget):
    """Pick lane-dense tiles / padded sizes that fit the VMEM budget."""
    Mp0, Kp0, Np0 = _round_up(M, 8), _round_up(K, 128), _round_up(N, 128)
    tm, tk, tn = min(tm, Mp0), min(tk, Kp0), min(tn, Np0)

    while True:
        Mp = _round_up(Mp0, tm)
        Kp = _round_up(Kp0, tk)
        Np = _round_up(Np0, tn)
        gm, gn, gk = Mp // tm, Np // tn, Kp // tk
        w_resident = (Kp * Np * 2) <= (4 << 20)  # whole weight in VMEM if small
        hoist_cast = (gn * gk) > 1

        # Rough VMEM footprint (double-buffered pipeline blocks + scratch).
        need = 0
        need += 2 * tm * Kp * in_bytes            # xk resident slab
        need += 2 * tm * Kp * in_bytes            # y1 resident slab
        need += 2 * tm * Kp * out_bytes           # o1 resident slab
        need += 2 * tm * tn * in_bytes            # y0 tile
        need += 2 * tm * tn * out_bytes           # o0 tile
        need += 2 * (Kp * Np if w_resident else tk * tn) * 2  # w (bf16)
        if gk > 1:
            need += tm * tn * 4                   # f32 accumulator scratch
        if hoist_cast:
            need += tm * Kp * 2                   # bf16 x scratch

        if need <= budget or tm <= 8:
            # TODO(synk): if even tm=8 overflows (huge K), tile the o1 path
            # over K instead of keeping full-K slabs resident.
            return tm, tn, tk, Mp, Kp, Np, gm, gn, gk, w_resident, hoist_cast

        tm = max(8, (tm // 2) // 8 * 8)


def _engine_forward_pallas(x, w_bf16, y0, y1, *, tm=128, tn=256, tk=256):
    """o0 = relu(x @ w + y0); o1 = x + y1 (single fused Pallas kernel)."""
    M, K = x.shape
    Kw, N = w_bf16.shape
    assert Kw == K
    assert y0.shape == (M, N) and y1.shape == (M, K)
    out_dtype = x.dtype
    # NOTE: emitting o0/o1 in bf16 would halve writeback bytes if downstream
    # tolerates it; kept in x.dtype to preserve the original engine contract.

    in_bytes = jnp.dtype(x.dtype).itemsize
    out_bytes = jnp.dtype(out_dtype).itemsize
    vmem_limit = _vmem_limit_bytes()

    (tm, tn, tk, Mp, Kp, Np, gm, gn, gk,
     w_resident, hoist_cast) = _plan_tiles(
        M, K, N, in_bytes, out_bytes, tm, tn, tk, budget=int(vmem_limit * 0.8)
    )

    # Zero padding is inert for matmul / add / relu and is sliced away below.
    xp = _pad2d(x, Mp, Kp)
    wp = _pad2d(w_bf16, Kp, Np)
    y0p = _pad2d(y0, Mp, Np)
    y1p = _pad2d(y1, Mp, Kp)

    if w_resident:
        w_spec = pl.BlockSpec((Kp, Np), lambda i, j, k: (0, 0))  # DMA'd once
    else:
        w_spec = pl.BlockSpec((tk, tn), lambda i, j, k: (k, j))

    scratch_shapes = []
    if gk > 1:
        scratch_shapes.append(pltpu.VMEM((tm, tn), jnp.float32))   # accumulator
    if hoist_cast:
        scratch_shapes.append(pltpu.VMEM((tm, Kp), jnp.bfloat16))  # cast-once x

    kernel = _make_engine_kernel(
        tk=tk, tn=tn, gk=gk, w_resident=w_resident, hoist_cast=hoist_cast
    )

    o0p, o1p = pl.pallas_call(
        kernel,
        out_shape=(
            jax.ShapeDtypeStruct((Mp, Np), out_dtype),
            jax.ShapeDtypeStruct((Mp, Kp), out_dtype),
        ),
        grid_spec=pltpu.PrefetchScalarGridSpec(
            num_scalar_prefetch=0,
            grid=(gm, gn, gk),
            in_specs=[
                pl.BlockSpec((tm, Kp), lambda i, j, k: (i, 0)),  # x, M-resident
                w_spec,                                          # w (bf16)
                pl.BlockSpec((tm, tn), lambda i, j, k: (i, j)),  # y0 (bias)
                pl.BlockSpec((tm, Kp), lambda i, j, k: (i, 0)),  # y1, M-resident
            ],
            out_specs=(
                pl.BlockSpec((tm, tn), lambda i, j, k: (i, j)),  # o0
                pl.BlockSpec((tm, Kp), lambda i, j, k: (i, 0)),  # o1, M-axis only
            ),
            scratch_shapes=scratch_shapes,
        ),
        compiler_params=pltpu.CompilerParams(
            # Only the M axis is core-parallel: o1's output spec ignores j/k,
            # so sharding j across v7x TensorCores would let a core flush an
            # o1 block it never wrote.
            dimension_semantics=("parallel", "arbitrary", "arbitrary"),
            vmem_limit_bytes=vmem_limit,
        ),
    )(xp, wp, y0p, y1p)

    return o0p[:M, :N], o1p[:M, :K]


# ----------------------------------------------------------------------------
# Synthetic engine + faithful AITModule dispatcher port
# ----------------------------------------------------------------------------
class SyntheticPallasEngine:
    """Stand-in for the opaque AITemplate engine (deterministic weights)."""

    def __init__(self, hidden: int):
        kw = jax.random.PRNGKey(42)
        # bf16 weight: halves HBM/VMEM bytes for the MXU operand.
        self.weight = (
            jax.random.normal(kw, (hidden, hidden), dtype=jnp.float32) * 0.1
        ).astype(jnp.bfloat16)
        self._fwd = jax.jit(_engine_forward_pallas)

    def forward(self, ait_args: List[jax.Array]) -> List[jax.Array]:
        assert len(ait_args) == 3, "synthetic engine expects [x, y0, y1]"
        x, y0, y1 = ait_args
        o0, o1 = self._fwd(x, self.weight, y0, y1)
        return [o0, o1]

    def profile(self, inputs, filename, num_iters):
        # TODO(synk): AITemplate's native per-op profiler has no Pallas
        # equivalent; use xprof / jax.profiler externally instead.
        raise NotImplementedError


class InterpResult:
    def __init__(self, input_names, fx_input_names):
        self.input_names = input_names
        self.fx_input_names = fx_input_names


class AITModule:
    """Faithful port of fx2ait AITModule.forward argument-dispatch semantics."""

    def __init__(self, engine=None, interp_result=None):
        self.engine = engine
        self.interp_result = interp_result
        self.ait_arg_names = interp_result.input_names if interp_result else None
        self.fx_arg_names = interp_result.fx_input_names if interp_result else None

    def __call__(self, *args, **kwargs):
        return self.forward(*args, **kwargs)

    def forward(self, *args, **kwargs):
        ait_args = []
        if self.interp_result:
            offset = 0
            for idx, fx_arg_name in enumerate(self.fx_arg_names):
                arg_name, *arg_idx = fx_arg_name.split(ARG_SPLITTER_KEYWORD)
                arg_idx = int(arg_idx[0]) if arg_idx else -1
                offset += 1 if arg_idx > 0 else 0
                if fx_arg_name in self.ait_arg_names:
                    if idx - offset < len(args):
                        arg_ref = args[idx - offset]
                    elif arg_name in kwargs:
                        arg_ref = kwargs[arg_name]
                    else:
                        raise RuntimeError(
                            f"Required input {fx_arg_name} not found"
                        )
                    ait_args.append(arg_ref[arg_idx] if arg_idx > -1 else arg_ref)
            assert len(ait_args) == len(self.ait_arg_names)
        else:
            all_args = list(args) + list(kwargs.values())
            for arg in all_args:
                ait_args.extend(arg if isinstance(arg, list) else [arg])
        outputs = self.engine.forward(ait_args)
        if len(outputs) == 1:
            return outputs[0]
        return tuple(outputs)

    def profile(self, inputs, filename: str, num_iters: int) -> None:
        self.engine.profile(inputs, filename, num_iters)

    @staticmethod
    def create_ait_module_wrapper(engine, interp_result, trace_ait_module, *inputs):
        mod = AITModule(engine, interp_result)
        mod(*inputs)
        # TODO(synk): torch.jit.trace has no JAX equivalent; jax.jit is applied
        # at the engine level instead.
        return mod


if __name__ == "__main__":
    key = jax.random.PRNGKey(0)
    kx, k0, k1 = jax.random.split(key, 3)

    x = jax.random.normal(kx, (BATCH, HIDDEN), dtype=jnp.float32)
    y0 = jax.random.normal(k0, (BATCH, HIDDEN), dtype=jnp.float32)
    y1 = jax.random.normal(k1, (BATCH, HIDDEN), dtype=jnp.float32)

    # fx arg names: one plain tensor arg "x" and one list arg "ys" that was
    # split into two entries by the AIT tracer.
    fx_names = [
        "x",
        f"ys{ARG_SPLITTER_KEYWORD}0",
        f"ys{ARG_SPLITTER_KEYWORD}1",
    ]
    interp_result = InterpResult(input_names=list(fx_names), fx_input_names=fx_names)

    engine = SyntheticPallasEngine(HIDDEN)
    mod = AITModule(engine, interp_result)

    # Mixed positional / keyword dispatch, list-typed kwarg (exercises the
    # offset / arg_idx logic of forward()).
    out0, out1 = mod(x, ys=[y0, y1])
    out0, out1 = jax.block_until_ready((out0, out1))

    # Reference check against plain-JAX semantics of the synthetic engine
    # (same bf16 MXU operands, f32 accumulation, f32 epilogue).
    ref0 = jnp.maximum(
        jnp.dot(
            x.astype(jnp.bfloat16),
            engine.weight,
            preferred_element_type=jnp.float32,
        )
        + y0,
        0.0,
    )
    ref1 = x + y1
    assert out0.shape == (BATCH, HIDDEN) and out1.shape == (BATCH, HIDDEN)
    assert jnp.allclose(out0, ref0, atol=1e-3, rtol=1e-3)
    assert jnp.allclose(out1, ref1, atol=1e-6, rtol=1e-6)

    print("KERNEL_OK")
</pallas_src>

<mosaic_0001>
module attributes {stable_mosaic.version = 11 : i64} {
  func.func @kernel(%arg0: i32, %arg1: i32, %arg2: i32, %arg3: memref<8x128xf32, #tpu.memory_space<vmem>>, %arg4: memref<128x128xbf16, #tpu.memory_space<vmem>>, %arg5: memref<8x128xf32, #tpu.memory_space<vmem>>, %arg6: memref<8x128xf32, #tpu.memory_space<vmem>>, %arg7: memref<8x128xf32, #tpu.memory_space<vmem>>, %arg8: memref<8x128xf32, #tpu.memory_space<vmem>>) attributes {dimension_semantics = [#tpu.dimension_semantics<parallel>, #tpu.dimension_semantics<arbitrary>, #tpu.dimension_semantics<arbitrary>], iteration_bounds = array<i64: 1, 1, 1>, scalar_prefetch = 0 : i64, scratch_operands = 0 : i64, tpu.core_type = #tpu.core_type<tc>, window_params = [{transform_indices = @transform_0, window_bounds = array<i64: 8, 128>}, {pipeline_mode = #tpu.pipeline_mode<synchronous>, transform_indices = @transform_1, window_bounds = array<i64: 128, 128>}, {transform_indices = @transform_2, window_bounds = array<i64: 8, 128>}, {transform_indices = @transform_3, window_bounds = array<i64: 8, 128>}, {transform_indices = @transform_4, window_bounds = array<i64: 8, 128>}, {transform_indices = @transform_5, window_bounds = array<i64: 8, 128>}]} {
    %c0_i32 = arith.constant 0 : i32
    %0 = arith.cmpi eq, %arg1, %c0_i32 : i32
    %c0_i32_0 = arith.constant 0 : i32
    %1 = arith.cmpi eq, %arg2, %c0_i32_0 : i32
    %2 = arith.andi %0, %1 : i1
    %3 = arith.extui %2 : i1 to i32
    %c0_i32_1 = arith.constant 0 : i32
    %4 = arith.cmpi ne, %3, %c0_i32_1 : i32
    scf.if %4 {
      %c0_8 = arith.constant 0 : index
      %c0_9 = arith.constant 0 : index
      %21 = vector.load %arg3[%c0_8, %c0_9] : memref<8x128xf32, #tpu.memory_space<vmem>>, vector<8x128xf32>
      %c0_10 = arith.constant 0 : index
      %c0_11 = arith.constant 0 : index
      %22 = vector.load %arg6[%c0_10, %c0_11] : memref<8x128xf32, #tpu.memory_space<vmem>>, vector<8x128xf32>
      %23 = arith.addf %21, %22 : vector<8x128xf32>
      %c0_12 = arith.constant 0 : index
      %c0_13 = arith.constant 0 : index
      %24 = vector.load %arg8[%c0_12, %c0_13] : memref<8x128xf32, #tpu.memory_space<vmem>>, vector<8x128xf32>
      tpu.vector_store %arg8[%c0_12, %c0_13], %23 {strides = array<i32>} : memref<8x128xf32, #tpu.memory_space<vmem>>, vector<8x128xf32>,
    } else {
    }
    %c128_i32 = arith.constant 128 : i32
    %5 = arith.muli %arg2, %c128_i32 : i32
    %6 = tpu.assume_multiple %5, 128 : i32
    %c0 = arith.constant 0 : index
    %7 = arith.index_cast %6 : i32 to index
    %8 = vector.load %arg3[%c0, %7] : memref<8x128xf32, #tpu.memory_space<vmem>>, vector<8x128xf32>
    %9 = arith.truncf %8 : vector<8x128xf32> to vector<8x128xbf16>
    %c128_i32_2 = arith.constant 128 : i32
    %10 = arith.muli %arg1, %c128_i32_2 : i32
    %11 = tpu.assume_multiple %10, 128 : i32
    %12 = arith.index_cast %6 : i32 to index
    %13 = arith.index_cast %11 : i32 to index
    %14 = vector.load %arg4[%12, %13] : memref<128x128xbf16, #tpu.memory_space<vmem>>, vector<128x128xbf16>
    %cst = arith.constant dense<0.000000e+00> : vector<8x128xf32>
    %15 = tpu.matmul %9, %14, %cst {dimension_numbers = #tpu.dot_dimension_numbers<[1], [0], [0], [1], [0, 0, 1, 1], [], []>} : vector<8x128xbf16>, vector<128x128xbf16>, vector<8x128xf32> -> vector<8x128xf32>
    %c0_3 = arith.constant 0 : index
    %c0_4 = arith.constant 0 : index
    %16 = vector.load %arg5[%c0_3, %c0_4] : memref<8x128xf32, #tpu.memory_space<vmem>>, vector<8x128xf32>
    %17 = arith.addf %15, %16 : vector<8x128xf32>
    %cst_5 = arith.constant 0.000000e+00 : f32
    %18 = vector.broadcast %cst_5 : f32 to vector<8x128xf32>
    %19 = arith.maximumf %17, %18 : vector<8x128xf32>
    %c0_6 = arith.constant 0 : index
    %c0_7 = arith.constant 0 : index
    %20 = vector.load %arg7[%c0_6, %c0_7] : memref<8x128xf32, #tpu.memory_space<vmem>>, vector<8x128xf32>
    tpu.vector_store %arg7[%c0_6, %c0_7], %19 {strides = array<i32>} : memref<8x128xf32, #tpu.memory_space<vmem>>, vector<8x128xf32>,
    return
  }
  func.func @transform_0(%arg0: i32, %arg1: i32, %arg2: i32) -> (i32, i32) {
    %c0_i32 = arith.constant 0 : i32
    %c0_i32_0 = arith.constant 0 : i32
    return %arg0, %c0_i32 : i32, i32
  }
  func.func @transform_1(%arg0: i32, %arg1: i32, %arg2: i32) -> (i32, i32) {
    %c0_i32 = arith.constant 0 : i32
    %c0_i32_0 = arith.constant 0 : i32
    %c0_i32_1 = arith.constant 0 : i32
    return %c0_i32, %c0_i32_0 : i32, i32
  }
  func.func @transform_2(%arg0: i32, %arg1: i32, %arg2: i32) -> (i32, i32) {
    %c0_i32 = arith.constant 0 : i32
    return %arg0, %arg1 : i32, i32
  }
  func.func @transform_3(%arg0: i32, %arg1: i32, %arg2: i32) -> (i32, i32) {
    %c0_i32 = arith.constant 0 : i32
    %c0_i32_0 = arith.constant 0 : i32
    return %arg0, %c0_i32 : i32, i32
  }
  func.func @transform_4(%arg0: i32, %arg1: i32, %arg2: i32) -> (i32, i32) {
    %c0_i32 = arith.constant 0 : i32
    return %arg0, %arg1 : i32, i32
  }
  func.func @transform_5(%arg0: i32, %arg1: i32, %arg2: i32) -> (i32, i32) {
    %c0_i32 = arith.constant 0 : i32
    %c0_i32_0 = arith.constant 0 : i32
    return %arg0, %c0_i32 : i32, i32
  }
}

</mosaic_0001>

<llo_original>
// kernel: _engine_forward_pallas.1
$region0: #{_engine_forward_pallas.1}
  #allocation0 [shape = 'u32[]', space=smem, size = 0x4, offset = 0x4, fixed_abs, tag = 'smem constant byte address 0x4 - core index']
  #allocation1 [shape = 'u32[144,128]{1,0:T(1,128)}', space=vmem, size = 0x12000, scoped, tag = 'internal scratch']
  %s0 = inlined_call_operand.vmem [shape: f32[8,128], index: 0, kind: input, shape index: {}]
  %s1 = inlined_call_operand.vmem [shape: bf16[128,128], index: 1, kind: input, shape index: {}]
  %s2 = inlined_call_operand.vmem [shape: f32[8,128], index: 2, kind: input, shape index: {}]
  %s3 = inlined_call_operand.vmem [shape: f32[8,128], index: 3, kind: input, shape index: {}]
  %s4 = inlined_call_operand.hbm [shape: f32[8,128], index: 4, kind: output, shape index: {0}]
  %s5 = inlined_call_operand.hbm [shape: f32[8,128], index: 5, kind: output, shape index: {1}]
  %6 = xla_tuple %s4, %s5
  %s7 = sld [smem:[#allocation0]]
  $region38: #{_engine_forward_pallas.1} parent=0
    _
  %s9 = ssub.s32 1, %s7
  %s10 = scalar_select 0, %s9, %s7
  $region1: #{_engine_forward_pallas.1} parent=0
    #allocation2 [shape = 'u8[4096]{0}', space=vmem, size = 0x1000, scoped, tag = 'output window, operand 0, single buffered']
    #allocation3 [shape = 's32[1]{0}', space=sflag, size = 0x4, scoped, tag = 'scoped memory for _engine_forward_pallas.1']
    #allocation4 [shape = 'u8[4096]{0}', space=vmem, size = 0x1000, scoped, tag = 'output window, operand 1, single buffered']
    #allocation5 [shape = 's32[1]{0}', space=sflag, size = 0x4, scoped, tag = 'scoped memory for _engine_forward_pallas.1']
    %11 = vsyncpa [#allocation3], 0
    %12 = vsyncpa [#allocation5], 0
    // Predicated region
    $region2: #{_engine_forward_pallas.1} parent=1 // pred_check
      _
    $region3: #{_engine_forward_pallas.1} parent=1 // pred_check_branch
      %14 = sbr.rel (0) target = $region5
    $region4: #{_engine_forward_pallas.1} parent=1 // pred_region
      _
    $region5: #{_engine_forward_pallas.1} parent=1 // pred_fallthru
      _
    // Predicated region
    $region6: #{_engine_forward_pallas.1} parent=1 // pred_check
      _
    $region7: #{_engine_forward_pallas.1} parent=1 // pred_check_branch
      %16 = sbr.rel (0) target = $region9
    $region8: #{_engine_forward_pallas.1} parent=1 // pred_region
      _
    $region9: #{_engine_forward_pallas.1} parent=1 // pred_fallthru
      _
    // Predicated region
    $region10: #{_engine_forward_pallas.1} parent=1 // pred_check
      _
    $region11: #{_engine_forward_pallas.1} parent=1 // pred_check_branch
      %18 = sbr.rel (0) target = $region13
    $region12: #{_engine_forward_pallas.1} parent=1 // pred_region
      _
    $region13: #{_engine_forward_pallas.1} parent=1 // pred_fallthru
      _
    // Predicated region
    $region14: #{_engine_forward_pallas.1} parent=1 // pred_check
      _
    $region15: #{_engine_forward_pallas.1} parent=1 // pred_check_branch
      %20 = sbr.rel (0) target = $region17
    $region16: #{_engine_forward_pallas.1} parent=1 // pred_region
      _
    $region17: #{_engine_forward_pallas.1} parent=1 // pred_fallthru
      _
    %p22 = scmp.eq.s32.totalorder 0, 0
    %p23 = scmp.eq.s32.totalorder 0, 0
    %p24 = pnand %p22, %p23
    %p25 = pneg %p24
    // Predicated region
    $region18: #{_engine_forward_pallas.1} parent=1 // pred_check
      _
    $region19: #{_engine_forward_pallas.1} parent=1 // pred_check_branch
      %27 = sbr.rel (%p24) target = $region21
    $region20: #{_engine_forward_pallas.1} parent=1 // pred_region
      %v28 = vld [vmem:[%s0] sm:$0xff]
      %v29 = vld [vmem:[%s3] sm:$0xff]
      %v30 = vadd.f32 %v28, %v29
      %31 = vst [vmem:[#allocation4] sm:$0xff] %v30
    $region21: #{_engine_forward_pallas.1} parent=1 // pred_fallthru
      _
    %s32 = smul.u32 0, 128
    %s33 = sshra.s32 %s32, 7
    %s34 = sand.u32 %s32, 127
    %s35 = scalar_lea.vmem %s0, %s33
    %v36 = vld [vmem:[%s35] sm:$0xff]
    %v37 = vpack.c.bf16 %v36, %v36
    %s38 = smul.u32 0, 128
    %s39 = sshra.s32 %s38, 7
    %s40 = sand.u32 %s38, 127
    %s41 = sshra.s32 %s32, 3
    %s42 = sand.u32 %s32, 7
    %s43 = sadd.s32 %s39, %s41
    %s44 = smul.addr %s43, 4
    %s45 = scalar_lea.vmem %s1, %s44
    %v46 = vld [vmem:[%s45] sm:$0xf]
    %v47 = vld [vmem:[%s45 + $0x4] sm:$0xf]
    %v48 = vld [vmem:[%s45 + $0x8] sm:$0xf]
    %v49 = vld [vmem:[%s45 + $0xc] sm:$0xf]
    %v50 = vld [vmem:[%s45 + $0x10] sm:$0xf]
    %v51 = vld [vmem:[%s45 + $0x14] sm:$0xf]
    %v52 = vld [vmem:[%s45 + $0x18] sm:$0xf]
    %v53 = vld [vmem:[%s45 + $0x1c] sm:$0xf]
    %v54 = vld [vmem:[%s45 + $0x20] sm:$0xf]
    %v55 = vld [vmem:[%s45 + $0x24] sm:$0xf]
    %v56 = vld [vmem:[%s45 + $0x28] sm:$0xf]
    %v57 = vld [vmem:[%s45 + $0x2c] sm:$0xf]
    %v58 = vld [vmem:[%s45 + $0x30] sm:$0xf]
    %v59 = vld [vmem:[%s45 + $0x34] sm:$0xf]
    %v60 = vld [vmem:[%s45 + $0x38] sm:$0xf]
    %v61 = vld [vmem:[%s45 + $0x3c] sm:$0xf]
    %v62 = vld [vmem:[%s2] sm:$0xff]
    %v79 = vunpack.c.l.b16 %v46
    %v80 = vunpack.c.l.b16 %v47
    %v81 = vunpack.c.l.b16 %v48
    %v82 = vunpack.c.l.b16 %v49
    %v83 = vunpack.c.l.b16 %v50
    %v84 = vunpack.c.l.b16 %v51
    %v85 = vunpack.c.l.b16 %v52
    %v86 = vunpack.c.l.b16 %v53
    %v87 = vunpack.c.l.b16 %v54
    %v88 = vunpack.c.l.b16 %v55
    %v89 = vunpack.c.l.b16 %v56
    %v90 = vunpack.c.l.b16 %v57
    %v91 = vunpack.c.l.b16 %v58
    %v92 = vunpack.c.l.b16 %v59
    %v93 = vunpack.c.l.b16 %v60
    %v94 = vunpack.c.l.b16 %v61
    %v95 = vpack.c.b16 %v80, %v79
    %v96 = vpack.c.b16 %v82, %v81
    %v97 = vpack.c.b16 %v84, %v83
    %v98 = vpack.c.b16 %v86, %v85
    %v99 = vpack.c.b16 %v88, %v87
    %v100 = vpack.c.b16 %v90, %v89
    %v101 = vpack.c.b16 %v92, %v91
    %v102 = vpack.c.b16 %v94, %v93
    %111 = vmatprep.subr.bf16.mxu0 0
    %112 = vmatpush1.bf16.msra.mxu0 %v95
    %113 = vmatprep.subr.bf16.mxu0 0
    %114 = vmatpush1.bf16.msra.mxu0 %v96
    %115 = vmatprep.subr.bf16.mxu0 0
    %116 = vmatpush1.bf16.msra.mxu0 %v97
    %117 = vmatprep.subr.bf16.mxu0 0
    %118 = vmatpush1.bf16.msra.mxu0 %v98
    %119 = vmatprep.subr.bf16.mxu0 0
    %120 = vmatpush1.bf16.msra.mxu0 %v99
    %121 = vmatprep.subr.bf16.mxu0 0
    %122 = vmatpush1.bf16.msra.mxu0 %v100
    %123 = vmatprep.subr.bf16.mxu0 0
    %124 = vmatpush1.bf16.msra.mxu0 %v101
    %125 = vmatprep.subr.bf16.mxu0 0
    %126 = vmatpush1.bf16.msra.mxu0 %v102
    %127 = vmatprep.subr.bf16.mxu0 0
    %128 = vmatpush1.bf16.msra.mxu0 0
    %129 = vmatprep.subr.bf16.mxu0 0
    %130 = vmatpush1.bf16.msra.mxu0 0
    %131 = vmatprep.subr.bf16.mxu0 0
    %132 = vmatpush1.bf16.msra.mxu0 0
    %133 = vmatprep.subr.bf16.mxu0 0
    %134 = vmatpush1.bf16.msra.mxu0 0
    %135 = vmatprep.subr.bf16.mxu0 0
    %136 = vmatpush1.bf16.msra.mxu0 0
    %137 = vmatprep.subr.bf16.mxu0 0
    %138 = vmatpush1.bf16.msra.mxu0 0
    %139 = vmatprep.subr.bf16.mxu0 0
    %140 = vmatpush1.bf16.msra.mxu0 0
    %141 = vmatprep.subr.bf16.mxu0 0
    %142 = vmatpush1.bf16.msra.mxu0 0
    %143 = vmatprep.mubr.bf16.mxu0 0
    %144 = vmatmul.mubr.bf16.gmra.mrb[0].mxu0 %v37
    %v145 = vpop.f32.mrb[0].mxu0
    %v146 = vadd.f32 %v62, %v145
    %v147 = vpop.f32.mrb[0].mxu0
    %v148 = vpop.f32.mrb[0].mxu0
    %v149 = vpop.f32.mrb[0].mxu0
    %150 = vdwg.mxu0
    %v151 = vmax.f32 %v146, 0.0
    %152 = vst [vmem:[#allocation2] sm:$0xff] %v151
    // Predicated region
    $region22: #{_engine_forward_pallas.1} parent=1 // pred_check
      _
    $region23: #{_engine_forward_pallas.1} parent=1 // pred_check_branch
      %154 = sbr.rel (0) target = $region25
    $region24: #{_engine_forward_pallas.1} parent=1 // pred_region
      %s156 = ssub.s32 128, 128
      %157 = vsyncadd [#allocation3], %s156
      %s159 = sshll.u32 [#allocation2], 4
      %s160 = int_to_ptr.vmem [resolvable:$true] %s159
      %162 = dma.vmem_to_hbm [thread:$0]  %s160, 128, %s4, [#allocation3]
    $region25: #{_engine_forward_pallas.1} parent=1 // pred_fallthru
      _
    // Predicated region
    $region26: #{_engine_forward_pallas.1} parent=1 // pred_check
      _
    $region27: #{_engine_forward_pallas.1} parent=1 // pred_check_branch
      %164 = sbr.rel (0) target = $region29
    $region28: #{_engine_forward_pallas.1} parent=1 // pred_region
      %s166 = ssub.s32 128, 128
      %167 = vsyncadd [#allocation5], %s166
      %s169 = sshll.u32 [#allocation4], 4
      %s170 = int_to_ptr.vmem [resolvable:$true] %s169
      %172 = dma.vmem_to_hbm [thread:$0]  %s170, 128, %s5, [#allocation5]
    $region29: #{_engine_forward_pallas.1} parent=1 // pred_fallthru
      _
    // Predicated region
    $region30: #{_engine_forward_pallas.1} parent=1 // pred_check
      _
    $region31: #{_engine_forward_pallas.1} parent=1 // pred_check_branch
      %174 = sbr.rel (0) target = $region33
    $region32: #{_engine_forward_pallas.1} parent=1 // pred_region
      %175 = dma.done [#allocation3], 128
    $region33: #{_engine_forward_pallas.1} parent=1 // pred_fallthru
      _
    // Predicated region
    $region34: #{_engine_forward_pallas.1} parent=1 // pred_check
      _
    $region35: #{_engine_forward_pallas.1} parent=1 // pred_check_branch
      %177 = sbr.rel (0) target = $region37
    $region36: #{_engine_forward_pallas.1} parent=1 // pred_region
      %178 = dma.done [#allocation5], 128
    $region37: #{_engine_forward_pallas.1} parent=1 // pred_fallthru
      _
    %179 = vsyncpa [#allocation3], 1
    %180 = vsyncpa [#allocation5], 1

</llo_original>
